<compile_context>
chip_gen: v7x
topology: tpu7x:2x2x1
jax: 0.10.0
libtpu: 0.0.40
codegen_flags: <defaults>
</compile_context>

<pallas_src>
import functools

import jax
import jax.numpy as jnp
from jax.experimental import pallas as pl
from jax.experimental.pallas import tpu as pltpu


def _ceil_div(a, b):
    return -(-a // b)


def _round_up(a, b):
    return _ceil_div(a, b) * b


def _l2norm_kernel(x_ref, w_ref, o_ref, *, eps):
    # x_ref: (bn, C, block_hw)   w_ref: (1, C, 1)   o_ref: (bn, C, block_hw)
    x = x_ref[...].astype(jnp.float32)
    # Channel reduction over the sublane axis (XLU); one result per lane column.
    sq_sum = jnp.sum(x * x, axis=1, keepdims=True)            # (bn, 1, block_hw)
    # NOTE: eps is added AFTER the sqrt to match the PyTorch module exactly
    # (do not fold into rsqrt(sum + eps)).
    norm = jnp.sqrt(sq_sum) + eps
    # One reciprocal per spatial column; exact (approx=False) to hold 1e-5.
    inv = pl.reciprocal(norm, approx=False)                    # (bn, 1, block_hw)
    o_ref[...] = (x * inv * w_ref[...]).astype(o_ref.dtype)


def l2norm_pallas(x_nchw, weight, eps=1e-10,
                  target_tile_bytes=4 << 20,       # per-step byte target (review: 4 MiB)
                  full_block_cap_bytes=8 << 20):   # allow full-HW blocks up to this size
    """x_nchw: (N, C, H, W); weight: (C,). Returns (N, C, H, W).

    Works for f32 or bf16 inputs (accumulation is always f32 in-kernel;
    output dtype matches input dtype).
    """
    N, C, H, W = x_nchw.shape
    HW = H * W

    # Free reshapes only — no transposes, no extra HBM traffic.
    x3d = x_nchw.reshape(N, C, HW)
    w3d = weight.astype(jnp.float32).reshape(1, C, 1)

    itemsize = jnp.dtype(x_nchw.dtype).itemsize
    # C sits on the sublane axis -> VMEM pads it to the packing multiple.
    # HBM traffic is unaffected, but budget VMEM with the padded size.
    sublane = {4: 8, 2: 16, 1: 32}.get(itemsize, 8)
    c_pad = _round_up(C, sublane)

    # Conservative VMEM budget that fits every generation (v7x: 64 MiB/TC
    # physical). Accounts for 2x double-buffered input + 2x output tiles plus
    # ~2 block-sized f32 temporaries from the in-kernel upcast.
    VMEM_SAFE_BUDGET = 40 << 20
    max_tile_bytes = VMEM_SAFE_BUDGET // (4 + 2 * (4 // itemsize))
    target = min(target_tile_bytes, max_tile_bytes)
    full_cap = min(full_block_cap_bytes, max_tile_bytes)

    slab_bytes = c_pad * HW * itemsize   # one image, full spatial extent, in VMEM

    if slab_bytes <= full_cap:
        # Full-HW lane blocks: every store is unmasked and lane-dense (no
        # ragged masked tail), and HW need not be a multiple of 128.
        block_hw = HW
        n_hw_blocks = 1
        # Pack multiple images per step until the tile reaches the byte target
        # (keeps grid steps large for small-C / small-feature-map shapes).
        bn = max(1, min(N, target // max(1, slab_bytes)))
        if N > 1:
            # Keep at least 2 grid steps so both v7x TensorCores get work.
            bn = min(bn, _ceil_div(N, 2))
        elif HW > 256:
            # Batch-1: split HW into 2 balanced 128-aligned blocks instead of
            # collapsing the grid to a single step (one idle TC on v7x).
            bn = 1
            block_hw = _round_up(_ceil_div(HW, 2), 128)
            n_hw_blocks = _ceil_div(HW, block_hw)
    else:
        # Spatial extent must be split: balance the blocks so no step is a
        # mostly-masked tail that still pays full per-step overhead.
        bn = 1
        max_lanes = max(128, target // (c_pad * itemsize))
        n_hw_blocks = _ceil_div(HW, max_lanes)
        block_hw = _round_up(_ceil_div(HW, n_hw_blocks), 128)
        if block_hw >= HW:
            block_hw = HW
            n_hw_blocks = 1
        else:
            n_hw_blocks = _ceil_div(HW, block_hw)

    grid = (_ceil_div(N, bn), n_hw_blocks)

    out3d = pl.pallas_call(
        functools.partial(_l2norm_kernel, eps=eps),
        out_shape=jax.ShapeDtypeStruct((N, C, HW), x_nchw.dtype),
        grid_spec=pltpu.PrefetchScalarGridSpec(
            num_scalar_prefetch=0,
            grid=grid,
            in_specs=[
                pl.BlockSpec((bn, C, block_hw), lambda n, j: (n, 0, j)),
                pl.BlockSpec((1, C, 1), lambda n, j: (0, 0, 0)),
            ],
            out_specs=pl.BlockSpec((bn, C, block_hw), lambda n, j: (n, 0, j)),
        ),
        compiler_params=pltpu.CompilerParams(
            # Both axes independent -> shard across the 2 TCs on v7x; no-op on
            # v5e/v6e single-TC chips.
            dimension_semantics=("parallel", "parallel"),
            # Headroom for the larger tiles: well above v5e's 16 MiB default
            # scoped limit, safely inside v7x's 64 MiB physical VMEM.
            vmem_limit_bytes=48 << 20,
        ),
    )(x3d, w3d)

    return out3d.reshape(N, C, H, W)


def _reference(x, weight, eps):
    norm = jnp.sqrt(jnp.sum(x * x, axis=1, keepdims=True)) + eps
    return weight.reshape(1, -1, 1, 1) * (x / norm)


if __name__ == "__main__":
    key = jax.random.PRNGKey(0)
    eps = 1e-10
    scale = 20.0  # L2Norm(n_channels=C, scale=20) -> weight initialized to 20

    # Primary small check (batch=2, channels=4, 16x16 spatial).
    N, C, H, W = 2, 4, 16, 16
    k1, k2 = jax.random.split(key)
    x = jax.random.normal(k1, (N, C, H, W), dtype=jnp.float32)
    weight = jnp.full((C,), scale, dtype=jnp.float32)

    out = jax.block_until_ready(l2norm_pallas(x, weight, eps=eps))
    ref = _reference(x, weight, eps)
    assert out.shape == (N, C, H, W)
    assert jnp.allclose(out, ref, atol=1e-5, rtol=1e-5)

    # Batch-1 check (exercises the >=2-grid-step HW split path).
    x1 = jax.random.normal(k2, (1, C, 32, 32), dtype=jnp.float32)
    out1 = jax.block_until_ready(l2norm_pallas(x1, weight, eps=eps))
    ref1 = _reference(x1, weight, eps)
    assert jnp.allclose(out1, ref1, atol=1e-5, rtol=1e-5)

    print("KERNEL_OK")
</pallas_src>

<mosaic_0001>
module attributes {stable_mosaic.version = 11 : i64} {
  func.func @_l2norm_kernel(%arg0: i32, %arg1: i32, %arg2: memref<1x4x256xf32, #tpu.memory_space<vmem>>, %arg3: memref<1x4x1xf32, #tpu.memory_space<vmem>>, %arg4: memref<1x4x256xf32, #tpu.memory_space<vmem>>) attributes {dimension_semantics = [#tpu.dimension_semantics<parallel>, #tpu.dimension_semantics<parallel>], iteration_bounds = array<i64: 2, 1>, scalar_prefetch = 0 : i64, scratch_operands = 0 : i64, tpu.core_type = #tpu.core_type<tc>, window_params = [{transform_indices = @transform_0, window_bounds = array<i64: 1, 4, 256>}, {pipeline_mode = #tpu.pipeline_mode<synchronous>, transform_indices = @transform_1, window_bounds = array<i64: 1, 4, 1>}, {transform_indices = @transform_2, window_bounds = array<i64: 1, 4, 256>}]} {
    %c0 = arith.constant 0 : index
    %c0_0 = arith.constant 0 : index
    %c0_1 = arith.constant 0 : index
    %0 = vector.load %arg2[%c0, %c0_0, %c0_1] : memref<1x4x256xf32, #tpu.memory_space<vmem>>, vector<1x4x256xf32>
    %1 = arith.mulf %0, %0 : vector<1x4x256xf32>
    %cst = arith.constant dense<0.000000e+00> : vector<1x256xf32>
    %2 = vector.multi_reduction <add>, %1, %cst [1] : vector<1x4x256xf32> to vector<1x256xf32>
    %3 = vector.shape_cast %2 : vector<1x256xf32> to vector<1x1x256xf32>
    %4 = math.sqrt %3 : vector<1x1x256xf32>
    %cst_2 = arith.constant 1.000000e-10 : f32
    %5 = vector.broadcast %cst_2 : f32 to vector<1x1x256xf32>
    %6 = arith.addf %4, %5 : vector<1x1x256xf32>
    %7 = tpu.reciprocal %6 : vector<1x1x256xf32> -> vector<1x1x256xf32>
    %8 = vector.broadcast %7 : vector<1x1x256xf32> to vector<1x4x256xf32>
    %9 = arith.mulf %0, %8 : vector<1x4x256xf32>
    %c0_3 = arith.constant 0 : index
    %c0_4 = arith.constant 0 : index
    %c0_5 = arith.constant 0 : index
    %10 = vector.load %arg3[%c0_3, %c0_4, %c0_5] : memref<1x4x1xf32, #tpu.memory_space<vmem>>, vector<1x4x1xf32>
    %11 = vector.broadcast %10 : vector<1x4x1xf32> to vector<1x4x256xf32>
    %12 = arith.mulf %9, %11 : vector<1x4x256xf32>
    %c0_6 = arith.constant 0 : index
    %c0_7 = arith.constant 0 : index
    %c0_8 = arith.constant 0 : index
    %13 = vector.load %arg4[%c0_6, %c0_7, %c0_8] : memref<1x4x256xf32, #tpu.memory_space<vmem>>, vector<1x4x256xf32>
    tpu.vector_store %arg4[%c0_6, %c0_7, %c0_8], %12 {strides = array<i32>} : memref<1x4x256xf32, #tpu.memory_space<vmem>>, vector<1x4x256xf32>,
    return
  }
  func.func @transform_0(%arg0: i32, %arg1: i32) -> (i32, i32, i32) {
    %c0_i32 = arith.constant 0 : i32
    %c0_i32_0 = arith.constant 0 : i32
    return %arg0, %c0_i32, %arg1 : i32, i32, i32
  }
  func.func @transform_1(%arg0: i32, %arg1: i32) -> (i32, i32, i32) {
    %c0_i32 = arith.constant 0 : i32
    %c0_i32_0 = arith.constant 0 : i32
    %c0_i32_1 = arith.constant 0 : i32
    %c0_i32_2 = arith.constant 0 : i32
    return %c0_i32, %c0_i32_0, %c0_i32_1 : i32, i32, i32
  }
  func.func @transform_2(%arg0: i32, %arg1: i32) -> (i32, i32, i32) {
    %c0_i32 = arith.constant 0 : i32
    %c0_i32_0 = arith.constant 0 : i32
    return %arg0, %c0_i32, %arg1 : i32, i32, i32
  }
}

</mosaic_0001>

<llo_original>
// kernel: tpu_custom_call.1
$region0: #{tpu_custom_call.1}
  #allocation0 [shape = 'u32[]', space=smem, size = 0x4, offset = 0x4, fixed_abs, tag = 'smem constant byte address 0x4 - core index']
  #allocation1 [shape = 'u32[144,128]{1,0:T(1,128)}', space=vmem, size = 0x12000, scoped, tag = 'internal scratch']
  %s0 = inlined_call_operand.hbm [shape: f32[2,4,256], index: 0, kind: input, shape index: {}]
  %s1 = inlined_call_operand.vmem [shape: f32[1,4,1], index: 1, kind: input, shape index: {}]
  %s2 = inlined_call_operand.hbm [shape: f32[2,4,256], index: 2, kind: output, shape index: {}]
  %s3 = sld [smem:[#allocation0]]
  $region45: #{tpu_custom_call.1} parent=0
    _
  %s5 = ssub.s32 1, %s3
  %s6 = scalar_select 0, %s5, %s3
  $region1: #{tpu_custom_call.1} parent=0
    #allocation2 [shape = 'u8[8192]{0}', space=vmem, size = 0x2000, scoped, tag = 'input window, operand 0']
    #allocation3 [shape = 's32[2]{0}', space=sflag, size = 0x8, scoped, tag = 'scoped memory for tpu_custom_call.1']
    #allocation4 [shape = 's32[2]{0}', space=sflag, size = 0x8, scoped, tag = 'scoped memory for tpu_custom_call.1']
    #allocation5 [shape = 'u8[8192]{0}', space=vmem, size = 0x2000, scoped, tag = 'output window, operand 0']
    %7 = vsyncpa [#allocation3], 0
    %s8 = scalar_lea.sflag [#allocation3], 1
    %9 = vsyncpa %s8, 0
    %10 = vsyncpa [#allocation4], 0
    %s11 = scalar_lea.sflag [#allocation4], 1
    %12 = vsyncpa %s11, 0
    loop: start=0, step=1, limit=4
    $region2: #{tpu_custom_call.1} parent=1 // loop_pre_header
      _
    $region3: #{tpu_custom_call.1} parent=1 // loop_header
      %s14 = sphi 0, %s18
      %p15 = scmp.ge.s32.totalorder %s14, 4
      %s21 = sphi 0, %s33
      %s22 = sphi 0, %s29
      %s23 = sphi 0, %s21
      %s24 = sphi 0, %s22
      %s25 = sphi 0, %s23
      %s26 = sphi 0, %s24
      %s38 = sphi 0, %s40
      %s41 = sphi 0, %s38
      %s42 = sphi 0, %s41
      %s58 = sphi 0, %s42
      %s62 = sphi 0, %s62
      %s64 = sphi 0, %s62
      %s65 = sphi 0, %s64
      %s79 = sphi 0, %s65
      %s87 = sphi 0, %s89
      %s90 = sphi 0, %s87
      %s91 = sphi 0, %s90
      %s107 = sphi 0, %s91
    $region4: #{tpu_custom_call.1} parent=1 // loop_header_branch
      %17 = sbr.rel (%p15) target = $region8
    $region5: #{tpu_custom_call.1} parent=1 // loop_body
      %s19 = ssub.s32 %s14, 1
      %s20 = ssub.s32 %s14, 2
      %s27 = sadd.s32 1, %s22
      %p28 = scmp.ge.s32.totalorder %s27, 1
      %s29 = scalar_select %p28, 0, %s27
      %s30 = sadd.s32 1, %s21
      %s31 = scalar_select %p28, %s30, %s21
      %p32 = scmp.ge.s32.totalorder %s31, 2
      %s33 = scalar_select %p32, 0, %s31
      %s34 = ssub.s32 %s21, %s33
      %s35 = ssub.s32 %s22, %s29
      %s36 = sor.u32 %s34, %s35
      %p37 = scmp.eq.s32.totalorder %s36, 0
      %s39 = sadd.s32 %s38, 1
      %s40 = scalar_select %p37, %s38, %s39
      %p43 = pneg %p37
      %p44 = scmp.eq.s32.totalorder %s14, 1
      %p45 = por %p43, %p44
      %p46 = scmp.ne.s32.totalorder %s38, %s41
      %p47 = scmp.eq.s32.totalorder %s14, 0
      %p48 = por %p46, %p47
      %p49 = scmp.ne.s32.totalorder %s38, %s41
      %p50 = scmp.eq.s32.totalorder %s19, 1
      %p51 = por %p49, %p50
      %p52 = scmp.ne.s32.totalorder %s41, %s42
      %p53 = scmp.eq.s32.totalorder %s19, 0
      %p54 = por %p52, %p53
      %p55 = scmp.ne.s32.totalorder %s41, %s42
      %p56 = scmp.eq.s32.totalorder %s20, 1
      %p57 = por %p55, %p56
      %p59 = scmp.ne.s32.totalorder %s42, %s58
      %p60 = scmp.eq.s32.totalorder %s20, 0
      %p61 = por %p59, %p60
      %s63 = sadd.s32 %s62, 1
      %p66 = scmp.eq.s32.totalorder %s14, 1
      %p67 = scmp.ne.s32.totalorder %s62, %s64
      %p68 = scmp.eq.s32.totalorder %s14, 0
      %p69 = por %p67, %p68
      %p70 = scmp.ne.s32.totalorder %s62, %s64
      %p71 = scmp.eq.s32.totalorder %s19, 1
      %p72 = por %p70, %p71
      %p73 = scmp.ne.s32.totalorder %s64, %s65
      %p74 = scmp.eq.s32.totalorder %s19, 0
      %p75 = por %p73, %p74
      %p76 = scmp.ne.s32.totalorder %s64, %s65
      %p77 = scmp.eq.s32.totalorder %s20, 1
      %p78 = por %p76, %p77
      %p80 = scmp.ne.s32.totalorder %s65, %s79
      %p81 = scmp.eq.s32.totalorder %s20, 0
      %p82 = por %p80, %p81
      %s83 = ssub.s32 %s21, %s33
      %s84 = ssub.s32 %s22, %s29
      %s85 = sor.u32 %s83, %s84
      %p86 = scmp.eq.s32.totalorder %s85, 0
      %s88 = sadd.s32 %s87, 1
      %s89 = scalar_select %p86, %s87, %s88
      %p92 = pneg %p86
      %p93 = scmp.eq.s32.totalorder %s14, 1
      %p94 = por %p92, %p93
      %p95 = scmp.ne.s32.totalorder %s87, %s90
      %p96 = scmp.eq.s32.totalorder %s14, 0
      %p97 = por %p95, %p96
      %p98 = scmp.ne.s32.totalorder %s87, %s90
      %p99 = scmp.eq.s32.totalorder %s19, 1
      %p100 = por %p98, %p99
      %p101 = scmp.ne.s32.totalorder %s90, %s91
      %p102 = scmp.eq.s32.totalorder %s19, 0
      %p103 = por %p101, %p102
      %p104 = scmp.ne.s32.totalorder %s90, %s91
      %p105 = scmp.eq.s32.totalorder %s20, 1
      %p106 = por %p104, %p105
      %p108 = scmp.ne.s32.totalorder %s91, %s107
      %p109 = scmp.eq.s32.totalorder %s20, 0
      %p110 = por %p108, %p109
      %p111 = scmp.le.s32.totalorder 1, %s14
      %p112 = scmp.lt.s32.totalorder %s14, 3
      %p113 = pnand %p111, %p112
      %p114 = pneg %p113
      // Predicated region
      $region9: #{tpu_custom_call.1} parent=5 // pred_check
        _
      $region10: #{tpu_custom_call.1} parent=5 // pred_check_branch
        %116 = sbr.rel (%p113) target = $region12
      $region11: #{tpu_custom_call.1} parent=5 // pred_region
        %s117 = ssub.s32 %s14, 1
        // Predicated region
        $region13: #{tpu_custom_call.1} parent=11 // pred_check
          %p118 = pneg %p75
        $region14: #{tpu_custom_call.1} parent=11 // pred_check_branch
          %120 = sbr.rel (%p118) target = $region16
        $region15: #{tpu_custom_call.1} parent=11 // pred_region
          _
        $region16: #{tpu_custom_call.1} parent=11 // pred_fallthru
          _
      $region12: #{tpu_custom_call.1} parent=5 // pred_fallthru
        _
      %p121 = scmp.lt.s32.totalorder %s14, 2
      // Predicated region
      $region17: #{tpu_custom_call.1} parent=5 // pred_check
        %p122 = pneg %p121
      $region18: #{tpu_custom_call.1} parent=5 // pred_check_branch
        %124 = sbr.rel (%p122) target = $region20
      $region19: #{tpu_custom_call.1} parent=5 // pred_region
        // Predicated region
        $region21: #{tpu_custom_call.1} parent=19 // pred_check
          %p125 = pneg %p48
        $region22: #{tpu_custom_call.1} parent=19 // pred_check_branch
          %127 = sbr.rel (%p125) target = $region24
        $region23: #{tpu_custom_call.1} parent=19 // pred_region
          %s128 = sand.u32 %s38, 1
          %s129 = scalar_lea.sflag [#allocation3], %s128
          %s130 = sand.u32 %s38, 1
          %s131 = smul.addr %s130, 8
          %s132 = scalar_lea.vmem [#allocation2], %s131
          %s133 = smul.u32 2, %s22
          %s135 = ssub.s32 128, 128
          %136 = vsyncadd %s129, %s135
          %s137 = smul.addr %s21, 2
          %s138 = sadd.s32 %s133, %s137
          %s139 = smul.addr %s138, 64
          %s140 = scalar_lea.hbm %s0, %s139
          %s142 = sshll.u32 %s132, 4
          %s143 = int_to_ptr.vmem [resolvable:$true] %s142
          %145 = dma.hbm_to_vmem [thread:$0]  %s140, 128, %s143, %s129
        $region24: #{tpu_custom_call.1} parent=19 // pred_fallthru
          _
      $region20: #{tpu_custom_call.1} parent=5 // pred_fallthru
        _
      %p146 = scmp.le.s32.totalorder 1, %s14
      %p147 = scmp.lt.s32.totalorder %s14, 3
      %p148 = pnand %p146, %p147
      %p149 = pneg %p148
      // Predicated region
      $region25: #{tpu_custom_call.1} parent=5 // pred_check
        _
      $region26: #{tpu_custom_call.1} parent=5 // pred_check_branch
        %151 = sbr.rel (%p148) target = $region28
      $region27: #{tpu_custom_call.1} parent=5 // pred_region
        %s152 = ssub.s32 %s14, 1
        %s153 = sand.u32 %s41, 1
        %s154 = scalar_lea.sflag [#allocation3], %s153
        %s155 = sand.u32 %s41, 1
        %s156 = smul.addr %s155, 8
        %s157 = scalar_lea.vmem [#allocation2], %s156
        // Predicated region
        $region29: #{tpu_custom_call.1} parent=27 // pred_check
          %p158 = pneg %p54
        $region30: #{tpu_custom_call.1} parent=27 // pred_check_branch
          %160 = sbr.rel (%p158) target = $region32
        $region31: #{tpu_custom_call.1} parent=27 // pred_region
          %161 = dma.done %s154, 128
        $region32: #{tpu_custom_call.1} parent=27 // pred_fallthru
          _
        %s162 = sand.u32 %s41, 1
        %s163 = scalar_lea.sflag [#allocation3], %s162
        %s164 = sand.u32 %s41, 1
        %s165 = smul.addr %s164, 8
        %s166 = scalar_lea.vmem [#allocation2], %s165
        %p167 = pneg %p54
        %p168 = pneg %p51
        %p169 = pneg %p75
        %p170 = pneg %p72
        %p171 = pneg %p103
        %p172 = pneg %p100
        %s173 = sand.u32 %s90, 1
        %s174 = scalar_lea.sflag [#allocation4], %s173
        %s175 = sand.u32 %s90, 1
        %s176 = smul.addr %s175, 8
        %s177 = scalar_lea.vmem [#allocation5], %s176
        %s178 = smul.u32 2, %s24
        %s179 = smul.u32 2, %s24
        %v180 = vld [vmem:[%s157] sm:$0xff]
        %v181 = vmul.f32 %v180, %v180
        %v183 = vcombine.high %v181, %v181
        %vm185 = vcmask 1043456
        %v186 = vsel %vm185, %v181, 0.0
        %v187 = vrot.slane %v186, 4
        %v188 = vadd.f32 %v186, %v187
        %v189 = vrot.slane %v188, 2
        %v190 = vadd.f32 %v188, %v189
        %v191 = vrot.slane %v190, 1
        %v192 = vadd.f32 %v190, %v191
        %v193 = vsel %vm185, %v183, 0.0
        %v194 = vrot.slane %v193, 4
        %v195 = vadd.f32 %v193, %v194
        %v196 = vrot.slane %v195, 2
        %v197 = vadd.f32 %v195, %v196
        %v198 = vrot.slane %v197, 1
        %v199 = vadd.f32 %v197, %v198
        %v200 = vrsqrt.pop %v192
        %v201 = vmul.f32 %v192, %v200
        %vm202 = vcmp.eq.f32.partialorder %v192, inf
        %v203 = vsel %vm202, %v192, %v201
        %vm204 = vcmp.eq.f32.partialorder %v192, 0.0
        %v205 = vand.u32 %v192, 2147483648
        %v206 = vsel %vm204, %v205, %v203
        %v207 = vrsqrt.pop %v199
        %v208 = vmul.f32 %v199, %v207
        %vm209 = vcmp.eq.f32.partialorder %v199, inf
        %v210 = vsel %vm209, %v199, %v208
        %vm211 = vcmp.eq.f32.partialorder %v199, 0.0
        %v212 = vand.u32 %v199, 2147483648
        %v213 = vsel %vm211, %v212, %v210
        %v214 = vadd.f32 %v206, 1e-10
        %v215 = vadd.f32 %v213, 1e-10
        %v216 = vrcp.pop %v214
        %v217 = vrcp.pop %v215
        %v220 = vcombine.low %v216, %v217
        %v222 = vmul.f32 %v180, %v220
        %v223 = vld [vmem:[%s1] sm:$0xf]
        %225 = vset.pattern.permute.xlu0 0
        %226 = vperm.xlu0 %225, %v223
        %v227 = vpop.permute.xlu0 %226
        %v229 = vunpack.c.l.s4 839922192
        %v230 = vunpack.c.0.s8 %v229
        %v231 = vlaneseq
        %v232 = vshrl.u32 %v231, 7
        %v233 = vsub.s32 %v230, %v232
        %v234 = vrot.slane %v227, %v233
        %v236 = vmul.f32 %v222, %v234
        %237 = vst [vmem:[%s177] sm:$0xff] %v236
        %s238 = sand.u32 %s90, 1
        %s239 = scalar_lea.sflag [#allocation4], %s238
        %s240 = sand.u32 %s90, 1
        %s241 = smul.addr %s240, 8
        %s242 = scalar_lea.vmem [#allocation5], %s241
        // Predicated region
        $region33: #{tpu_custom_call.1} parent=27 // pred_check
          %p243 = pneg %p100
        $region34: #{tpu_custom_call.1} parent=27 // pred_check_branch
          %245 = sbr.rel (%p243) target = $region36
        $region35: #{tpu_custom_call.1} parent=27 // pred_region
          %s246 = smul.u32 2, %s24
          %s248 = ssub.s32 128, 128
          %249 = vsyncadd %s239, %s248
          %s250 = smul.addr %s23, 2
          %s251 = sadd.s32 %s246, %s250
          %s252 = smul.addr %s251, 64
          %s253 = scalar_lea.hbm %s2, %s252
          %s255 = sshll.u32 %s242, 4
          %s256 = int_to_ptr.vmem [resolvable:$true] %s255
          %258 = dma.vmem_to_hbm [thread:$0]  %s256, 128, %s253, %s239
        $region36: #{tpu_custom_call.1} parent=27 // pred_fallthru
          _
      $region28: #{tpu_custom_call.1} parent=5 // pred_fallthru
        _
      %p259 = scmp.le.s32.totalorder 2, %s14
      // Predicated region
      $region37: #{tpu_custom_call.1} parent=5 // pred_check
        %p260 = pneg %p259
      $region38: #{tpu_custom_call.1} parent=5 // pred_check_branch
        %262 = sbr.rel (%p260) target = $region40
      $region39: #{tpu_custom_call.1} parent=5 // pred_region
        %s263 = ssub.s32 %s14, 2
        // Predicated region
        $region41: #{tpu_custom_call.1} parent=39 // pred_check
          %p264 = pneg %p106
        $region42: #{tpu_custom_call.1} parent=39 // pred_check_branch
          %266 = sbr.rel (%p264) target = $region44
        $region43: #{tpu_custom_call.1} parent=39 // pred_region
          %s267 = sand.u32 %s91, 1
          %s268 = scalar_lea.sflag [#allocation4], %s267
          %s269 = sand.u32 %s91, 1
          %s270 = smul.addr %s269, 8
          %s271 = scalar_lea.vmem [#allocation5], %s270
          %272 = dma.done %s268, 128
        $region44: #{tpu_custom_call.1} parent=39 // pred_fallthru
          _
      $region40: #{tpu_custom_call.1} parent=5 // pred_fallthru
        _
    $region6: #{tpu_custom_call.1} parent=1 // loop_footer
      %s18 = sadd.s32 1, %s14
    $region7: #{tpu_custom_call.1} parent=1 // loop_footer_branch
      %13 = sbr.rel target = $region3
    $region8: #{tpu_custom_call.1} parent=1 // loop_exit
      _
    %273 = vsyncpa [#allocation3], 1
    %s274 = scalar_lea.sflag [#allocation3], 1
    %275 = vsyncpa %s274, 1
    %276 = vsyncpa [#allocation4], 1
    %s277 = scalar_lea.sflag [#allocation4], 1
    %278 = vsyncpa %s277, 1

</llo_original>
